<compile_context>
chip_gen: v7x
topology: tpu7x:2x2x1
jax: 0.10.0
libtpu: 0.0.40
codegen_flags: <defaults>
</compile_context>

<pallas_src>
import math
import functools

import jax
import jax.numpy as jnp
from jax.experimental import pallas as pl
from jax.experimental.pallas import tpu as pltpu


LN_EPS = 1e-5  # PyTorch nn.LayerNorm default


def _round_up(x, m):
    return ((x + m - 1) // m) * m


def _make_fused_mlp_kernel(real_hidden_dims, n_hidden):
    """Builds the fused kernel body.

    Ref layout (positional):
      x_ref,
      [w, b, gamma, beta] * n_hidden,      # hidden layers
      w_final, b_final,
      out_ref
    """

    def kernel(*refs):
        x_ref = refs[0]
        out_ref = refs[-1]

        h = x_ref[...].astype(jnp.float32)
        r = 1
        for li in range(n_hidden):
            w = refs[r][...]
            b = refs[r + 1][...]
            g = refs[r + 2][...]
            beta = refs[r + 3][...]
            r += 4

            # Linear (MXU, f32 accumulation) + bias
            z = jnp.dot(h, w, preferred_element_type=jnp.float32) + b
            # ReLU  (padded lanes: 0 weight/bias -> 0 -> stays 0)
            z = jnp.maximum(z, 0.0)
            # Dropout: identity (eval mode).

            # LayerNorm over the REAL feature count (padded lanes contribute 0 to sums).
            d_real = real_hidden_dims[li]
            d_pad = z.shape[-1]
            inv_d = 1.0 / float(d_real)
            mean = jnp.sum(z, axis=-1, keepdims=True) * inv_d
            if d_pad != d_real:
                col = jax.lax.broadcasted_iota(jnp.int32, (1, d_pad), 1)
                centered = jnp.where(col < d_real, z - mean, 0.0)
            else:
                centered = z - mean
            var = jnp.sum(centered * centered, axis=-1, keepdims=True) * inv_d
            normed = (z - mean) * jax.lax.rsqrt(var + LN_EPS)
            # gamma/beta are zero in the padded tail -> padded lanes become exactly 0.
            h = normed * g + beta

        # Final Linear (no activation)
        w = refs[r][...]
        b = refs[r + 1][...]
        y = jnp.dot(h, w, preferred_element_type=jnp.float32) + b
        out_ref[...] = y.astype(out_ref.dtype)

    return kernel


def make_fully_connected(input_dim, hidden_dims, output_dim):
    """Returns (init_fn, apply_fn) for the fused-MLP Pallas kernel.

    Weights are stored transposed vs. PyTorch, i.e. [in_features, out_features],
    so each layer is  y = x @ W + b.
    """
    hidden_dims = tuple(int(h) for h in hidden_dims)
    n_hidden = len(hidden_dims)

    def init_fn(key):
        """PyTorch defaults: Linear U(-1/sqrt(fan_in), +1/sqrt(fan_in)); LN gamma=1, beta=0."""
        hidden_params = []
        current = input_dim
        for hd in hidden_dims:
            key, kw, kb = jax.random.split(key, 3)
            bound = 1.0 / math.sqrt(current)
            hidden_params.append(dict(
                w=jax.random.uniform(kw, (current, hd), jnp.float32, -bound, bound),
                b=jax.random.uniform(kb, (1, hd), jnp.float32, -bound, bound),
                gamma=jnp.ones((1, hd), jnp.float32),
                beta=jnp.zeros((1, hd), jnp.float32),
            ))
            current = hd
        key, kw, kb = jax.random.split(key, 3)
        bound = 1.0 / math.sqrt(current)
        final_params = dict(
            w=jax.random.uniform(kw, (current, output_dim), jnp.float32, -bound, bound),
            b=jax.random.uniform(kb, (1, output_dim), jnp.float32, -bound, bound),
        )
        # Only array leaves -> jit-safe pytree.
        return dict(hidden=tuple(hidden_params), final=final_params)

    def apply_fn(params, x):
        batch = x.shape[0]

        # Batch tiling: TB multiple of 8 (sublane), capped at 128.
        tb = min(128, _round_up(batch, 8))
        b_pad = _round_up(batch, tb)

        # Lane-dense (128-multiple) padded feature dims.
        in_pad = _round_up(input_dim, 128)
        real_dims = list(hidden_dims) + [output_dim]
        pad_dims = [_round_up(d, 128) for d in real_dims]
        out_pad = pad_dims[-1]

        x = x.astype(jnp.float32)
        xp = jnp.pad(x, ((0, b_pad - batch), (0, in_pad - input_dim)))

        args = [xp]
        in_specs = [pl.BlockSpec((tb, in_pad), lambda i: (i, 0))]

        prev_pad, prev_real = in_pad, input_dim
        for li, hp in enumerate(params["hidden"]):
            dp, dr = pad_dims[li], real_dims[li]
            w = jnp.pad(hp["w"], ((0, prev_pad - prev_real), (0, dp - dr)))
            b = jnp.pad(hp["b"], ((0, 0), (0, dp - dr)))
            g = jnp.pad(hp["gamma"], ((0, 0), (0, dp - dr)))
            be = jnp.pad(hp["beta"], ((0, 0), (0, dp - dr)))
            args += [w, b, g, be]
            # Constant index_maps -> weights stay VMEM-resident across grid steps.
            in_specs += [
                pl.BlockSpec((prev_pad, dp), lambda i: (0, 0)),
                pl.BlockSpec((1, dp), lambda i: (0, 0)),
                pl.BlockSpec((1, dp), lambda i: (0, 0)),
                pl.BlockSpec((1, dp), lambda i: (0, 0)),
            ]
            prev_pad, prev_real = dp, dr

        fp = params["final"]
        w = jnp.pad(fp["w"], ((0, prev_pad - prev_real), (0, out_pad - output_dim)))
        b = jnp.pad(fp["b"], ((0, 0), (0, out_pad - output_dim)))
        args += [w, b]
        in_specs += [
            pl.BlockSpec((prev_pad, out_pad), lambda i: (0, 0)),
            pl.BlockSpec((1, out_pad), lambda i: (0, 0)),
        ]

        kernel = _make_fused_mlp_kernel(real_dims, n_hidden)

        out = pl.pallas_call(
            kernel,
            out_shape=jax.ShapeDtypeStruct((b_pad, out_pad), jnp.float32),
            grid=(b_pad // tb,),
            in_specs=in_specs,
            out_specs=pl.BlockSpec((tb, out_pad), lambda i: (i, 0)),
            compiler_params=pltpu.CompilerParams(
                dimension_semantics=("parallel",),
            ),
        )(*args)

        return out[:batch, :output_dim]

    return init_fn, jax.jit(apply_fn)


def _reference_forward(x, params):
    """Pure-JAX reference (unpadded), mirroring PyTorch eval-mode semantics."""
    h = x.astype(jnp.float32)
    for hp in params["hidden"]:
        h = jnp.maximum(h @ hp["w"] + hp["b"], 0.0)
        mean = jnp.mean(h, axis=-1, keepdims=True)
        var = jnp.mean((h - mean) ** 2, axis=-1, keepdims=True)
        h = (h - mean) / jnp.sqrt(var + LN_EPS) * hp["gamma"] + hp["beta"]
    fp = params["final"]
    return h @ fp["w"] + fp["b"]


if __name__ == "__main__":
    # Small shapes consistent with FoveaPosPredictor's FullyConnected
    # (hidden_dims=[256, 128, 32], output_dim=8), with a reduced input dim.
    batch = 8
    input_dim = 64
    hidden_dims = (256, 128, 32)
    output_dim = 8

    key = jax.random.PRNGKey(0)
    key, kx = jax.random.split(key)
    x = jax.random.normal(kx, (batch, input_dim), jnp.float32)

    init_fn, apply_fn = make_fully_connected(input_dim, hidden_dims, output_dim)
    params = init_fn(key)

    out = apply_fn(params, x)
    out = jax.block_until_ready(out)

    ref = _reference_forward(x, params)
    assert out.shape == (batch, output_dim), out.shape
    assert jnp.allclose(out, ref, atol=2e-4, rtol=2e-4), (
        "mismatch vs JAX reference: max abs err = %f" % float(jnp.max(jnp.abs(out - ref)))
    )

    print("KERNEL_OK")
</pallas_src>

<mosaic_0001>
module attributes {stable_mosaic.version = 11 : i64} {
  func.func @kernel(%arg0: i32, %arg1: memref<8x128xf32, #tpu.memory_space<vmem>>, %arg2: memref<128x256xf32, #tpu.memory_space<vmem>>, %arg3: memref<1x256xf32, #tpu.memory_space<vmem>>, %arg4: memref<1x256xf32, #tpu.memory_space<vmem>>, %arg5: memref<1x256xf32, #tpu.memory_space<vmem>>, %arg6: memref<256x128xf32, #tpu.memory_space<vmem>>, %arg7: memref<1x128xf32, #tpu.memory_space<vmem>>, %arg8: memref<1x128xf32, #tpu.memory_space<vmem>>, %arg9: memref<1x128xf32, #tpu.memory_space<vmem>>, %arg10: memref<128x128xf32, #tpu.memory_space<vmem>>, %arg11: memref<1x128xf32, #tpu.memory_space<vmem>>, %arg12: memref<1x128xf32, #tpu.memory_space<vmem>>, %arg13: memref<1x128xf32, #tpu.memory_space<vmem>>, %arg14: memref<128x128xf32, #tpu.memory_space<vmem>>, %arg15: memref<1x128xf32, #tpu.memory_space<vmem>>, %arg16: memref<8x128xf32, #tpu.memory_space<vmem>>) attributes {dimension_semantics = [#tpu.dimension_semantics<parallel>], iteration_bounds = array<i64: 1>, scalar_prefetch = 0 : i64, scratch_operands = 0 : i64, tpu.core_type = #tpu.core_type<tc>, window_params = [{transform_indices = @transform_0, window_bounds = array<i64: 8, 128>}, {pipeline_mode = #tpu.pipeline_mode<synchronous>, transform_indices = @transform_1, window_bounds = array<i64: 128, 256>}, {pipeline_mode = #tpu.pipeline_mode<synchronous>, transform_indices = @transform_2, window_bounds = array<i64: 1, 256>}, {pipeline_mode = #tpu.pipeline_mode<synchronous>, transform_indices = @transform_3, window_bounds = array<i64: 1, 256>}, {pipeline_mode = #tpu.pipeline_mode<synchronous>, transform_indices = @transform_4, window_bounds = array<i64: 1, 256>}, {pipeline_mode = #tpu.pipeline_mode<synchronous>, transform_indices = @transform_5, window_bounds = array<i64: 256, 128>}, {pipeline_mode = #tpu.pipeline_mode<synchronous>, transform_indices = @transform_6, window_bounds = array<i64: 1, 128>}, {pipeline_mode = #tpu.pipeline_mode<synchronous>, transform_indices = @transform_7, window_bounds = array<i64: 1, 128>}, {pipeline_mode = #tpu.pipeline_mode<synchronous>, transform_indices = @transform_8, window_bounds = array<i64: 1, 128>}, {pipeline_mode = #tpu.pipeline_mode<synchronous>, transform_indices = @transform_9, window_bounds = array<i64: 128, 128>}, {pipeline_mode = #tpu.pipeline_mode<synchronous>, transform_indices = @transform_10, window_bounds = array<i64: 1, 128>}, {pipeline_mode = #tpu.pipeline_mode<synchronous>, transform_indices = @transform_11, window_bounds = array<i64: 1, 128>}, {pipeline_mode = #tpu.pipeline_mode<synchronous>, transform_indices = @transform_12, window_bounds = array<i64: 1, 128>}, {pipeline_mode = #tpu.pipeline_mode<synchronous>, transform_indices = @transform_13, window_bounds = array<i64: 128, 128>}, {pipeline_mode = #tpu.pipeline_mode<synchronous>, transform_indices = @transform_14, window_bounds = array<i64: 1, 128>}, {transform_indices = @transform_15, window_bounds = array<i64: 8, 128>}]} {
    %c0 = arith.constant 0 : index
    %c0_0 = arith.constant 0 : index
    %0 = vector.load %arg1[%c0, %c0_0] : memref<8x128xf32, #tpu.memory_space<vmem>>, vector<8x128xf32>
    %c0_1 = arith.constant 0 : index
    %c0_2 = arith.constant 0 : index
    %1 = vector.load %arg2[%c0_1, %c0_2] : memref<128x256xf32, #tpu.memory_space<vmem>>, vector<128x256xf32>
    %c0_3 = arith.constant 0 : index
    %c0_4 = arith.constant 0 : index
    %2 = vector.load %arg3[%c0_3, %c0_4] : memref<1x256xf32, #tpu.memory_space<vmem>>, vector<1x256xf32>
    %c0_5 = arith.constant 0 : index
    %c0_6 = arith.constant 0 : index
    %3 = vector.load %arg4[%c0_5, %c0_6] : memref<1x256xf32, #tpu.memory_space<vmem>>, vector<1x256xf32>
    %c0_7 = arith.constant 0 : index
    %c0_8 = arith.constant 0 : index
    %4 = vector.load %arg5[%c0_7, %c0_8] : memref<1x256xf32, #tpu.memory_space<vmem>>, vector<1x256xf32>
    %cst = arith.constant dense<0.000000e+00> : vector<8x256xf32>
    %5 = tpu.matmul %0, %1, %cst {dimension_numbers = #tpu.dot_dimension_numbers<[1], [0], [0], [1], [0, 0, 1, 1], [], []>} : vector<8x128xf32>, vector<128x256xf32>, vector<8x256xf32> -> vector<8x256xf32>
    %6 = vector.broadcast %2 : vector<1x256xf32> to vector<8x256xf32>
    %7 = arith.addf %5, %6 : vector<8x256xf32>
    %cst_9 = arith.constant 0.000000e+00 : f32
    %8 = vector.broadcast %cst_9 : f32 to vector<8x256xf32>
    %9 = arith.maximumf %7, %8 : vector<8x256xf32>
    %cst_10 = arith.constant dense<0.000000e+00> : vector<8xf32>
    %10 = vector.multi_reduction <add>, %9, %cst_10 [1] : vector<8x256xf32> to vector<8xf32>
    %11 = vector.shape_cast %10 : vector<8xf32> to vector<8x1xf32>
    %cst_11 = arith.constant 3.906250e-03 : f32
    %12 = vector.broadcast %cst_11 : f32 to vector<8x1xf32>
    %13 = arith.mulf %11, %12 : vector<8x1xf32>
    %14 = vector.broadcast %13 : vector<8x1xf32> to vector<8x256xf32>
    %15 = arith.subf %9, %14 : vector<8x256xf32>
    %16 = arith.mulf %15, %15 : vector<8x256xf32>
    %cst_12 = arith.constant dense<0.000000e+00> : vector<8xf32>
    %17 = vector.multi_reduction <add>, %16, %cst_12 [1] : vector<8x256xf32> to vector<8xf32>
    %18 = vector.shape_cast %17 : vector<8xf32> to vector<8x1xf32>
    %cst_13 = arith.constant 3.906250e-03 : f32
    %19 = vector.broadcast %cst_13 : f32 to vector<8x1xf32>
    %20 = arith.mulf %18, %19 : vector<8x1xf32>
    %21 = vector.broadcast %13 : vector<8x1xf32> to vector<8x256xf32>
    %22 = arith.subf %9, %21 : vector<8x256xf32>
    %cst_14 = arith.constant 9.99999974E-6 : f32
    %23 = vector.broadcast %cst_14 : f32 to vector<8x1xf32>
    %24 = arith.addf %20, %23 : vector<8x1xf32>
    %25 = math.rsqrt %24 : vector<8x1xf32>
    %26 = vector.broadcast %25 : vector<8x1xf32> to vector<8x256xf32>
    %27 = arith.mulf %22, %26 : vector<8x256xf32>
    %28 = vector.broadcast %3 : vector<1x256xf32> to vector<8x256xf32>
    %29 = arith.mulf %27, %28 : vector<8x256xf32>
    %30 = vector.broadcast %4 : vector<1x256xf32> to vector<8x256xf32>
    %31 = arith.addf %29, %30 : vector<8x256xf32>
    %c0_15 = arith.constant 0 : index
    %c0_16 = arith.constant 0 : index
    %32 = vector.load %arg6[%c0_15, %c0_16] : memref<256x128xf32, #tpu.memory_space<vmem>>, vector<256x128xf32>
    %c0_17 = arith.constant 0 : index
    %c0_18 = arith.constant 0 : index
    %33 = vector.load %arg7[%c0_17, %c0_18] : memref<1x128xf32, #tpu.memory_space<vmem>>, vector<1x128xf32>
    %c0_19 = arith.constant 0 : index
    %c0_20 = arith.constant 0 : index
    %34 = vector.load %arg8[%c0_19, %c0_20] : memref<1x128xf32, #tpu.memory_space<vmem>>, vector<1x128xf32>
    %c0_21 = arith.constant 0 : index
    %c0_22 = arith.constant 0 : index
    %35 = vector.load %arg9[%c0_21, %c0_22] : memref<1x128xf32, #tpu.memory_space<vmem>>, vector<1x128xf32>
    %cst_23 = arith.constant dense<0.000000e+00> : vector<8x128xf32>
    %36 = tpu.matmul %31, %32, %cst_23 {dimension_numbers = #tpu.dot_dimension_numbers<[1], [0], [0], [1], [0, 0, 1, 1], [], []>} : vector<8x256xf32>, vector<256x128xf32>, vector<8x128xf32> -> vector<8x128xf32>
    %37 = vector.broadcast %33 : vector<1x128xf32> to vector<8x128xf32>
    %38 = arith.addf %36, %37 : vector<8x128xf32>
    %cst_24 = arith.constant 0.000000e+00 : f32
    %39 = vector.broadcast %cst_24 : f32 to vector<8x128xf32>
    %40 = arith.maximumf %38, %39 : vector<8x128xf32>
    %cst_25 = arith.constant dense<0.000000e+00> : vector<8xf32>
    %41 = vector.multi_reduction <add>, %40, %cst_25 [1] : vector<8x128xf32> to vector<8xf32>
    %42 = vector.shape_cast %41 : vector<8xf32> to vector<8x1xf32>
    %cst_26 = arith.constant 7.812500e-03 : f32
    %43 = vector.broadcast %cst_26 : f32 to vector<8x1xf32>
    %44 = arith.mulf %42, %43 : vector<8x1xf32>
    %45 = vector.broadcast %44 : vector<8x1xf32> to vector<8x128xf32>
    %46 = arith.subf %40, %45 : vector<8x128xf32>
    %47 = arith.mulf %46, %46 : vector<8x128xf32>
    %cst_27 = arith.constant dense<0.000000e+00> : vector<8xf32>
    %48 = vector.multi_reduction <add>, %47, %cst_27 [1] : vector<8x128xf32> to vector<8xf32>
    %49 = vector.shape_cast %48 : vector<8xf32> to vector<8x1xf32>
    %cst_28 = arith.constant 7.812500e-03 : f32
    %50 = vector.broadcast %cst_28 : f32 to vector<8x1xf32>
    %51 = arith.mulf %49, %50 : vector<8x1xf32>
    %52 = vector.broadcast %44 : vector<8x1xf32> to vector<8x128xf32>
    %53 = arith.subf %40, %52 : vector<8x128xf32>
    %cst_29 = arith.constant 9.99999974E-6 : f32
    %54 = vector.broadcast %cst_29 : f32 to vector<8x1xf32>
    %55 = arith.addf %51, %54 : vector<8x1xf32>
    %56 = math.rsqrt %55 : vector<8x1xf32>
    %57 = vector.broadcast %56 : vector<8x1xf32> to vector<8x128xf32>
    %58 = arith.mulf %53, %57 : vector<8x128xf32>
    %59 = vector.broadcast %34 : vector<1x128xf32> to vector<8x128xf32>
    %60 = arith.mulf %58, %59 : vector<8x128xf32>
    %61 = vector.broadcast %35 : vector<1x128xf32> to vector<8x128xf32>
    %62 = arith.addf %60, %61 : vector<8x128xf32>
    %c0_30 = arith.constant 0 : index
    %c0_31 = arith.constant 0 : index
    %63 = vector.load %arg10[%c0_30, %c0_31] : memref<128x128xf32, #tpu.memory_space<vmem>>, vector<128x128xf32>
    %c0_32 = arith.constant 0 : index
    %c0_33 = arith.constant 0 : index
    %64 = vector.load %arg11[%c0_32, %c0_33] : memref<1x128xf32, #tpu.memory_space<vmem>>, vector<1x128xf32>
    %c0_34 = arith.constant 0 : index
    %c0_35 = arith.constant 0 : index
    %65 = vector.load %arg12[%c0_34, %c0_35] : memref<1x128xf32, #tpu.memory_space<vmem>>, vector<1x128xf32>
    %c0_36 = arith.constant 0 : index
    %c0_37 = arith.constant 0 : index
    %66 = vector.load %arg13[%c0_36, %c0_37] : memref<1x128xf32, #tpu.memory_space<vmem>>, vector<1x128xf32>
    %cst_38 = arith.constant dense<0.000000e+00> : vector<8x128xf32>
    %67 = tpu.matmul %62, %63, %cst_38 {dimension_numbers = #tpu.dot_dimension_numbers<[1], [0], [0], [1], [0, 0, 1, 1], [], []>} : vector<8x128xf32>, vector<128x128xf32>, vector<8x128xf32> -> vector<8x128xf32>
    %68 = vector.broadcast %64 : vector<1x128xf32> to vector<8x128xf32>
    %69 = arith.addf %67, %68 : vector<8x128xf32>
    %cst_39 = arith.constant 0.000000e+00 : f32
    %70 = vector.broadcast %cst_39 : f32 to vector<8x128xf32>
    %71 = arith.maximumf %69, %70 : vector<8x128xf32>
    %cst_40 = arith.constant dense<0.000000e+00> : vector<8xf32>
    %72 = vector.multi_reduction <add>, %71, %cst_40 [1] : vector<8x128xf32> to vector<8xf32>
    %73 = vector.shape_cast %72 : vector<8xf32> to vector<8x1xf32>
    %cst_41 = arith.constant 3.125000e-02 : f32
    %74 = vector.broadcast %cst_41 : f32 to vector<8x1xf32>
    %75 = arith.mulf %73, %74 : vector<8x1xf32>
    %76 = tpu.iota {dimensions = array<i32: 1>} : vector<1x128xi32>
    %c32_i32 = arith.constant 32 : i32
    %77 = vector.broadcast %c32_i32 : i32 to vector<1x128xi32>
    %78 = arith.cmpi slt, %76, %77 : vector<1x128xi32>
    %79 = vector.broadcast %75 : vector<8x1xf32> to vector<8x128xf32>
    %80 = arith.subf %71, %79 : vector<8x128xf32>
    %cst_42 = arith.constant 0.000000e+00 : f32
    %81 = vector.shape_cast %78 : vector<1x128xi1> to vector<1x128xi1>
    %82 = vector.broadcast %81 : vector<1x128xi1> to vector<8x128xi1>
    %83 = vector.broadcast %cst_42 : f32 to vector<8x128xf32>
    %84 = arith.select %82, %80, %83 : vector<8x128xi1>, vector<8x128xf32>
    %85 = arith.mulf %84, %84 : vector<8x128xf32>
    %cst_43 = arith.constant dense<0.000000e+00> : vector<8xf32>
    %86 = vector.multi_reduction <add>, %85, %cst_43 [1] : vector<8x128xf32> to vector<8xf32>
    %87 = vector.shape_cast %86 : vector<8xf32> to vector<8x1xf32>
    %cst_44 = arith.constant 3.125000e-02 : f32
    %88 = vector.broadcast %cst_44 : f32 to vector<8x1xf32>
    %89 = arith.mulf %87, %88 : vector<8x1xf32>
    %90 = vector.broadcast %75 : vector<8x1xf32> to vector<8x128xf32>
    %91 = arith.subf %71, %90 : vector<8x128xf32>
    %cst_45 = arith.constant 9.99999974E-6 : f32
    %92 = vector.broadcast %cst_45 : f32 to vector<8x1xf32>
    %93 = arith.addf %89, %92 : vector<8x1xf32>
    %94 = math.rsqrt %93 : vector<8x1xf32>
    %95 = vector.broadcast %94 : vector<8x1xf32> to vector<8x128xf32>
    %96 = arith.mulf %91, %95 : vector<8x128xf32>
    %97 = vector.broadcast %65 : vector<1x128xf32> to vector<8x128xf32>
    %98 = arith.mulf %96, %97 : vector<8x128xf32>
    %99 = vector.broadcast %66 : vector<1x128xf32> to vector<8x128xf32>
    %100 = arith.addf %98, %99 : vector<8x128xf32>
    %c0_46 = arith.constant 0 : index
    %c0_47 = arith.constant 0 : index
    %101 = vector.load %arg14[%c0_46, %c0_47] : memref<128x128xf32, #tpu.memory_space<vmem>>, vector<128x128xf32>
    %c0_48 = arith.constant 0 : index
    %c0_49 = arith.constant 0 : index
    %102 = vector.load %arg15[%c0_48, %c0_49] : memref<1x128xf32, #tpu.memory_space<vmem>>, vector<1x128xf32>
    %cst_50 = arith.constant dense<0.000000e+00> : vector<8x128xf32>
    %103 = tpu.matmul %100, %101, %cst_50 {dimension_numbers = #tpu.dot_dimension_numbers<[1], [0], [0], [1], [0, 0, 1, 1], [], []>} : vector<8x128xf32>, vector<128x128xf32>, vector<8x128xf32> -> vector<8x128xf32>
    %104 = vector.broadcast %102 : vector<1x128xf32> to vector<8x128xf32>
    %105 = arith.addf %103, %104 : vector<8x128xf32>
    %c0_51 = arith.constant 0 : index
    %c0_52 = arith.constant 0 : index
    %106 = vector.load %arg16[%c0_51, %c0_52] : memref<8x128xf32, #tpu.memory_space<vmem>>, vector<8x128xf32>
    tpu.vector_store %arg16[%c0_51, %c0_52], %105 {strides = array<i32>} : memref<8x128xf32, #tpu.memory_space<vmem>>, vector<8x128xf32>,
    return
  }
  func.func @transform_0(%arg0: i32) -> (i32, i32) {
    %c0_i32 = arith.constant 0 : i32
    %c0_i32_0 = arith.constant 0 : i32
    return %arg0, %c0_i32 : i32, i32
  }
  func.func @transform_1(%arg0: i32) -> (i32, i32) {
    %c0_i32 = arith.constant 0 : i32
    %c0_i32_0 = arith.constant 0 : i32
    %c0_i32_1 = arith.constant 0 : i32
    return %c0_i32, %c0_i32_0 : i32, i32
  }
  func.func @transform_2(%arg0: i32) -> (i32, i32) {
    %c0_i32 = arith.constant 0 : i32
    %c0_i32_0 = arith.constant 0 : i32
    %c0_i32_1 = arith.constant 0 : i32
    return %c0_i32, %c0_i32_0 : i32, i32
  }
  func.func @transform_3(%arg0: i32) -> (i32, i32) {
    %c0_i32 = arith.constant 0 : i32
    %c0_i32_0 = arith.constant 0 : i32
    %c0_i32_1 = arith.constant 0 : i32
    return %c0_i32, %c0_i32_0 : i32, i32
  }
  func.func @transform_4(%arg0: i32) -> (i32, i32) {
    %c0_i32 = arith.constant 0 : i32
    %c0_i32_0 = arith.constant 0 : i32
    %c0_i32_1 = arith.constant 0 : i32
    return %c0_i32, %c0_i32_0 : i32, i32
  }
  func.func @transform_5(%arg0: i32) -> (i32, i32) {
    %c0_i32 = arith.constant 0 : i32
    %c0_i32_0 = arith.constant 0 : i32
    %c0_i32_1 = arith.constant 0 : i32
    return %c0_i32, %c0_i32_0 : i32, i32
  }
  func.func @transform_6(%arg0: i32) -> (i32, i32) {
    %c0_i32 = arith.constant 0 : i32
    %c0_i32_0 = arith.constant 0 : i32
    %c0_i32_1 = arith.constant 0 : i32
    return %c0_i32, %c0_i32_0 : i32, i32
  }
  func.func @transform_7(%arg0: i32) -> (i32, i32) {
    %c0_i32 = arith.constant 0 : i32
    %c0_i32_0 = arith.constant 0 : i32
    %c0_i32_1 = arith.constant 0 : i32
    return %c0_i32, %c0_i32_0 : i32, i32
  }
  func.func @transform_8(%arg0: i32) -> (i32, i32) {
    %c0_i32 = arith.constant 0 : i32
    %c0_i32_0 = arith.constant 0 : i32
    %c0_i32_1 = arith.constant 0 : i32
    return %c0_i32, %c0_i32_0 : i32, i32
  }
  func.func @transform_9(%arg0: i32) -> (i32, i32) {
    %c0_i32 = arith.constant 0 : i32
    %c0_i32_0 = arith.constant 0 : i32
    %c0_i32_1 = arith.constant 0 : i32
    return %c0_i32, %c0_i32_0 : i32, i32
  }
  func.func @transform_10(%arg0: i32) -> (i32, i32) {
    %c0_i32 = arith.constant 0 : i32
    %c0_i32_0 = arith.constant 0 : i32
    %c0_i32_1 = arith.constant 0 : i32
    return %c0_i32, %c0_i32_0 : i32, i32
  }
  func.func @transform_11(%arg0: i32) -> (i32, i32) {
    %c0_i32 = arith.constant 0 : i32
    %c0_i32_0 = arith.constant 0 : i32
    %c0_i32_1 = arith.constant 0 : i32
    return %c0_i32, %c0_i32_0 : i32, i32
  }
  func.func @transform_12(%arg0: i32) -> (i32, i32) {
    %c0_i32 = arith.constant 0 : i32
    %c0_i32_0 = arith.constant 0 : i32
    %c0_i32_1 = arith.constant 0 : i32
    return %c0_i32, %c0_i32_0 : i32, i32
  }
  func.func @transform_13(%arg0: i32) -> (i32, i32) {
    %c0_i32 = arith.constant 0 : i32
    %c0_i32_0 = arith.constant 0 : i32
    %c0_i32_1 = arith.constant 0 : i32
    return %c0_i32, %c0_i32_0 : i32, i32
  }
  func.func @transform_14(%arg0: i32) -> (i32, i32) {
    %c0_i32 = arith.constant 0 : i32
    %c0_i32_0 = arith.constant 0 : i32
    %c0_i32_1 = arith.constant 0 : i32
    return %c0_i32, %c0_i32_0 : i32, i32
  }
  func.func @transform_15(%arg0: i32) -> (i32, i32) {
    %c0_i32 = arith.constant 0 : i32
    %c0_i32_0 = arith.constant 0 : i32
    return %arg0, %c0_i32 : i32, i32
  }
}

</mosaic_0001>

<llo_original>
// kernel: apply_fn.1
$region0: #{apply_fn.1}
  #allocation0 [shape = 'u32[]', space=smem, size = 0x4, offset = 0x4, fixed_abs, tag = 'smem constant byte address 0x4 - core index']
  #allocation1 [shape = 'u32[144,128]{1,0:T(1,128)}', space=vmem, size = 0x12000, scoped, tag = 'internal scratch']
  %s0 = inlined_call_operand.vmem [shape: f32[8,128], index: 0, kind: input, shape index: {}]
  %s1 = inlined_call_operand.vmem [shape: f32[128,256], index: 1, kind: input, shape index: {}]
  %s2 = inlined_call_operand.vmem [shape: f32[1,256], index: 2, kind: input, shape index: {}]
  %s3 = inlined_call_operand.vmem [shape: f32[1,256], index: 3, kind: input, shape index: {}]
  %s4 = inlined_call_operand.vmem [shape: f32[1,256], index: 4, kind: input, shape index: {}]
  %s5 = inlined_call_operand.vmem [shape: f32[256,128], index: 5, kind: input, shape index: {}]
  %s6 = inlined_call_operand.vmem [shape: f32[1,128], index: 6, kind: input, shape index: {}]
  %s7 = inlined_call_operand.vmem [shape: f32[1,128], index: 7, kind: input, shape index: {}]
  %s8 = inlined_call_operand.vmem [shape: f32[1,128], index: 8, kind: input, shape index: {}]
  %s9 = inlined_call_operand.vmem [shape: f32[128,128], index: 9, kind: input, shape index: {}]
  %s10 = inlined_call_operand.vmem [shape: f32[1,128], index: 10, kind: input, shape index: {}]
  %s11 = inlined_call_operand.vmem [shape: f32[1,128], index: 11, kind: input, shape index: {}]
  %s12 = inlined_call_operand.vmem [shape: f32[1,128], index: 12, kind: input, shape index: {}]
  %s13 = inlined_call_operand.vmem [shape: f32[128,128], index: 13, kind: input, shape index: {}]
  %s14 = inlined_call_operand.vmem [shape: f32[1,128], index: 14, kind: input, shape index: {}]
  %s15 = inlined_call_operand.hbm [shape: f32[8,128], index: 15, kind: output, shape index: {}]
  %s16 = sld [smem:[#allocation0]]
  $region70: #{apply_fn.1} parent=0
    _
  %s18 = ssub.s32 1, %s16
  %s19 = scalar_select 0, %s18, %s16
  $region1: #{apply_fn.1} parent=0
    #allocation2 [shape = 'u8[4096]{0}', space=vmem, size = 0x1000, scoped, tag = 'output window, operand 0, single buffered']
    #allocation3 [shape = 's32[1]{0}', space=sflag, size = 0x4, scoped, tag = 'scoped memory for apply_fn.1']
    %20 = vsyncpa [#allocation3], 0
    // Predicated region
    $region2: #{apply_fn.1} parent=1 // pred_check
      _
    $region3: #{apply_fn.1} parent=1 // pred_check_branch
      %22 = sbr.rel (0) target = $region5
    $region4: #{apply_fn.1} parent=1 // pred_region
      _
    $region5: #{apply_fn.1} parent=1 // pred_fallthru
      _
    // Predicated region
    $region6: #{apply_fn.1} parent=1 // pred_check
      _
    $region7: #{apply_fn.1} parent=1 // pred_check_branch
      %24 = sbr.rel (0) target = $region9
    $region8: #{apply_fn.1} parent=1 // pred_region
      _
    $region9: #{apply_fn.1} parent=1 // pred_fallthru
      _
    // Predicated region
    $region10: #{apply_fn.1} parent=1 // pred_check
      _
    $region11: #{apply_fn.1} parent=1 // pred_check_branch
      %26 = sbr.rel (0) target = $region13
    $region12: #{apply_fn.1} parent=1 // pred_region
      _
    $region13: #{apply_fn.1} parent=1 // pred_fallthru
      _
    // Predicated region
    $region14: #{apply_fn.1} parent=1 // pred_check
      _
    $region15: #{apply_fn.1} parent=1 // pred_check_branch
      %28 = sbr.rel (0) target = $region17
    $region16: #{apply_fn.1} parent=1 // pred_region
      _
    $region17: #{apply_fn.1} parent=1 // pred_fallthru
      _
    // Predicated region
    $region18: #{apply_fn.1} parent=1 // pred_check
      _
    $region19: #{apply_fn.1} parent=1 // pred_check_branch
      %30 = sbr.rel (0) target = $region21
    $region20: #{apply_fn.1} parent=1 // pred_region
      _
    $region21: #{apply_fn.1} parent=1 // pred_fallthru
      _
    // Predicated region
    $region22: #{apply_fn.1} parent=1 // pred_check
      _
    $region23: #{apply_fn.1} parent=1 // pred_check_branch
      %32 = sbr.rel (0) target = $region25
    $region24: #{apply_fn.1} parent=1 // pred_region
      _
    $region25: #{apply_fn.1} parent=1 // pred_fallthru
      _
    // Predicated region
    $region26: #{apply_fn.1} parent=1 // pred_check
      _
    $region27: #{apply_fn.1} parent=1 // pred_check_branch
      %34 = sbr.rel (0) target = $region29
    $region28: #{apply_fn.1} parent=1 // pred_region
      _
    $region29: #{apply_fn.1} parent=1 // pred_fallthru
      _
    // Predicated region
    $region30: #{apply_fn.1} parent=1 // pred_check
      _
    $region31: #{apply_fn.1} parent=1 // pred_check_branch
      %36 = sbr.rel (0) target = $region33
    $region32: #{apply_fn.1} parent=1 // pred_region
      _
    $region33: #{apply_fn.1} parent=1 // pred_fallthru
      _
    // Predicated region
    $region34: #{apply_fn.1} parent=1 // pred_check
      _
    $region35: #{apply_fn.1} parent=1 // pred_check_branch
      %38 = sbr.rel (0) target = $region37
    $region36: #{apply_fn.1} parent=1 // pred_region
      _
    $region37: #{apply_fn.1} parent=1 // pred_fallthru
      _
    // Predicated region
    $region38: #{apply_fn.1} parent=1 // pred_check
      _
    $region39: #{apply_fn.1} parent=1 // pred_check_branch
      %40 = sbr.rel (0) target = $region41
    $region40: #{apply_fn.1} parent=1 // pred_region
      _
    $region41: #{apply_fn.1} parent=1 // pred_fallthru
      _
    // Predicated region
    $region42: #{apply_fn.1} parent=1 // pred_check
      _
    $region43: #{apply_fn.1} parent=1 // pred_check_branch
      %42 = sbr.rel (0) target = $region45
    $region44: #{apply_fn.1} parent=1 // pred_region
      _
    $region45: #{apply_fn.1} parent=1 // pred_fallthru
      _
    // Predicated region
    $region46: #{apply_fn.1} parent=1 // pred_check
      _
    $region47: #{apply_fn.1} parent=1 // pred_check_branch
      %44 = sbr.rel (0) target = $region49
    $region48: #{apply_fn.1} parent=1 // pred_region
      _
    $region49: #{apply_fn.1} parent=1 // pred_fallthru
      _
    // Predicated region
    $region50: #{apply_fn.1} parent=1 // pred_check
      _
    $region51: #{apply_fn.1} parent=1 // pred_check_branch
      %46 = sbr.rel (0) target = $region53
    $region52: #{apply_fn.1} parent=1 // pred_region
      _
    $region53: #{apply_fn.1} parent=1 // pred_fallthru
      _
    // Predicated region
    $region54: #{apply_fn.1} parent=1 // pred_check
      _
    $region55: #{apply_fn.1} parent=1 // pred_check_branch
      %48 = sbr.rel (0) target = $region57
    $region56: #{apply_fn.1} parent=1 // pred_region
      _
    $region57: #{apply_fn.1} parent=1 // pred_fallthru
      _
    // Predicated region
    $region58: #{apply_fn.1} parent=1 // pred_check
      _
    $region59: #{apply_fn.1} parent=1 // pred_check_branch
      %50 = sbr.rel (0) target = $region61
    $region60: #{apply_fn.1} parent=1 // pred_region
      _
    $region61: #{apply_fn.1} parent=1 // pred_fallthru
      _
    %v51 = vld [vmem:[%s0] sm:$0xff]
    %v52 = vld [vmem:[%s1] sm:$0xff]
    %v53 = vld [vmem:[%s1 + $0x8] sm:$0xff]
    %v54 = vld [vmem:[%s1 + $0x10] sm:$0xff]
    %v55 = vld [vmem:[%s1 + $0x18] sm:$0xff]
    %v56 = vld [vmem:[%s1 + $0x20] sm:$0xff]
    %v57 = vld [vmem:[%s1 + $0x28] sm:$0xff]
    %v58 = vld [vmem:[%s1 + $0x30] sm:$0xff]
    %v59 = vld [vmem:[%s1 + $0x38] sm:$0xff]
    %v60 = vld [vmem:[%s1 + $0x40] sm:$0xff]
    %v61 = vld [vmem:[%s1 + $0x48] sm:$0xff]
    %v62 = vld [vmem:[%s1 + $0x50] sm:$0xff]
    %v63 = vld [vmem:[%s1 + $0x58] sm:$0xff]
    %v64 = vld [vmem:[%s1 + $0x60] sm:$0xff]
    %v65 = vld [vmem:[%s1 + $0x68] sm:$0xff]
    %v66 = vld [vmem:[%s1 + $0x70] sm:$0xff]
    %v67 = vld [vmem:[%s1 + $0x78] sm:$0xff]
    %v68 = vld [vmem:[%s1 + $0x80] sm:$0xff]
    %v69 = vld [vmem:[%s1 + $0x88] sm:$0xff]
    %v70 = vld [vmem:[%s1 + $0x90] sm:$0xff]
    %v71 = vld [vmem:[%s1 + $0x98] sm:$0xff]
    %v72 = vld [vmem:[%s1 + $0xa0] sm:$0xff]
    %v73 = vld [vmem:[%s1 + $0xa8] sm:$0xff]
    %v74 = vld [vmem:[%s1 + $0xb0] sm:$0xff]
    %v75 = vld [vmem:[%s1 + $0xb8] sm:$0xff]
    %v76 = vld [vmem:[%s1 + $0xc0] sm:$0xff]
    %v77 = vld [vmem:[%s1 + $0xc8] sm:$0xff]
    %v78 = vld [vmem:[%s1 + $0xd0] sm:$0xff]
    %v79 = vld [vmem:[%s1 + $0xd8] sm:$0xff]
    %v80 = vld [vmem:[%s1 + $0xe0] sm:$0xff]
    %v81 = vld [vmem:[%s1 + $0xe8] sm:$0xff]
    %v82 = vld [vmem:[%s1 + $0xf0] sm:$0xff]
    %v83 = vld [vmem:[%s1 + $0xf8] sm:$0xff]
    %v84 = vld [vmem:[%s2] sm:$0x3]
    %v85 = vld [vmem:[%s3] sm:$0x3]
    %v86 = vld [vmem:[%s4] sm:$0x3]
    %v88 = vlaneseq
    %v89 = vshrl.u32 %v88, 7
    %v90 = vsub.s32 0, %v89
    %v91 = vrot.slane %v84, %v90
    %v92 = vlaneseq
    %v93 = vshrl.u32 %v92, 7
    %v94 = vsub.s32 1, %v93
    %v95 = vrot.slane %v84, %v94
    %98 = vmatprep.subr.mxu0 %v53
    %99 = vmatpush1.msra.mxu0 %v52
    %100 = vmatprep.subr.mxu0 %v55
    %101 = vmatpush1.msra.mxu0 %v54
    %102 = vmatprep.subr.mxu0 %v57
    %103 = vmatpush1.msra.mxu0 %v56
    %104 = vmatprep.subr.mxu0 %v59
    %105 = vmatpush1.msra.mxu0 %v58
    %106 = vmatprep.subr.mxu0 %v61
    %107 = vmatpush1.msra.mxu0 %v60
    %108 = vmatprep.subr.mxu0 %v63
    %109 = vmatpush1.msra.mxu0 %v62
    %110 = vmatprep.subr.mxu0 %v65
    %111 = vmatpush1.msra.mxu0 %v64
    %112 = vmatprep.subr.mxu0 %v67
    %113 = vmatpush1.msra.mxu0 %v66
    %114 = vmatprep.subr.mxu0 %v69
    %115 = vmatpush1.msra.mxu0 %v68
    %116 = vmatprep.subr.mxu0 %v71
    %117 = vmatpush1.msra.mxu0 %v70
    %118 = vmatprep.subr.mxu0 %v73
    %119 = vmatpush1.msra.mxu0 %v72
    %120 = vmatprep.subr.mxu0 %v75
    %121 = vmatpush1.msra.mxu0 %v74
    %122 = vmatprep.subr.mxu0 %v77
    %123 = vmatpush1.msra.mxu0 %v76
    %124 = vmatprep.subr.mxu0 %v79
    %125 = vmatpush1.msra.mxu0 %v78
    %126 = vmatprep.subr.mxu0 %v81
    %127 = vmatpush1.msra.mxu0 %v80
    %128 = vmatprep.subr.mxu0 %v83
    %129 = vmatpush1.msra.mxu0 %v82
    %130 = vmatprep.subr.mxu0 0.0
    %131 = vmatpush1.msra.mxu0 0.0
    %132 = vmatprep.subr.mxu0 0.0
    %133 = vmatpush1.msra.mxu0 0.0
    %134 = vmatprep.subr.mxu0 0.0
    %135 = vmatpush1.msra.mxu0 0.0
    %136 = vmatprep.subr.mxu0 0.0
    %137 = vmatpush1.msra.mxu0 0.0
    %138 = vmatprep.subr.mxu0 0.0
    %139 = vmatpush1.msra.mxu0 0.0
    %140 = vmatprep.subr.mxu0 0.0
    %141 = vmatpush1.msra.mxu0 0.0
    %142 = vmatprep.subr.mxu0 0.0
    %143 = vmatpush1.msra.mxu0 0.0
    %144 = vmatprep.subr.mxu0 0.0
    %145 = vmatpush1.msra.mxu0 0.0
    %146 = vmatprep.subr.mxu0 0.0
    %147 = vmatpush1.msra.mxu0 0.0
    %148 = vmatprep.subr.mxu0 0.0
    %149 = vmatpush1.msra.mxu0 0.0
    %150 = vmatprep.subr.mxu0 0.0
    %151 = vmatpush1.msra.mxu0 0.0
    %152 = vmatprep.subr.mxu0 0.0
    %153 = vmatpush1.msra.mxu0 0.0
    %154 = vmatprep.subr.mxu0 0.0
    %155 = vmatpush1.msra.mxu0 0.0
    %156 = vmatprep.subr.mxu0 0.0
    %157 = vmatpush1.msra.mxu0 0.0
    %158 = vmatprep.subr.mxu0 0.0
    %159 = vmatpush1.msra.mxu0 0.0
    %160 = vmatprep.subr.mxu0 0.0
    %161 = vmatpush1.msra.mxu0 0.0
    %162 = vmatprep.mubr.f32.mxu0 0.0
    %163 = vmatmul.mubr.f32.gmra.mrb[0].mxu0 %v51
    %v164 = vpop.f32.mrb[0].mxu0
    %v165 = vadd.f32 %v91, %v164
    %v166 = vpop.f32.mrb[0].mxu0
    %v167 = vadd.f32 %v95, %v166
    %168 = vdwg.mxu0
    %v169 = vmax.f32 %v165, 0.0
    %v170 = vmax.f32 %v167, 0.0
    %v171 = vadd.f32 %v169, %v170
    %172 = vadd.xlane.f32.xlu0 %v171
    %v173 = vpop.xlane.xlu0 %172
    %v174 = vmul.f32 %v173, 0.00390625
    %v175 = vsub.f32 %v169, %v174
    %v176 = vsub.f32 %v170, %v174
    %v177 = vmul.f32 %v175, %v175
    %v178 = vmul.f32 %v176, %v176
    %v179 = vadd.f32 %v177, %v178
    %180 = vadd.xlane.f32.xlu0 %v179
    %v181 = vpop.xlane.xlu0 %180
    %v182 = vmul.f32 %v181, 0.00390625
    %v183 = vadd.f32 %v182, 1e-05
    %v184 = vrsqrt.pop %v183
    %v185 = vmul.f32 %v175, %v184
    %v186 = vmul.f32 %v176, %v184
    %v188 = vlaneseq
    %v189 = vshrl.u32 %v188, 7
    %v190 = vsub.s32 0, %v189
    %v191 = vrot.slane %v85, %v190
    %v192 = vlaneseq
    %v193 = vshrl.u32 %v192, 7
    %v194 = vsub.s32 1, %v193
    %v195 = vrot.slane %v85, %v194
    %v198 = vmul.f32 %v185, %v191
    %v199 = vmul.f32 %v186, %v195
    %v201 = vlaneseq
    %v202 = vshrl.u32 %v201, 7
    %v203 = vsub.s32 0, %v202
    %v204 = vrot.slane %v86, %v203
    %v205 = vlaneseq
    %v206 = vshrl.u32 %v205, 7
    %v207 = vsub.s32 1, %v206
    %v208 = vrot.slane %v86, %v207
    %v211 = vadd.f32 %v198, %v204
    %v212 = vadd.f32 %v199, %v208
    %v213 = vld [vmem:[%s5] sm:$0xff]
    %v214 = vld [vmem:[%s5 + $0x8] sm:$0xff]
    %v215 = vld [vmem:[%s5 + $0x10] sm:$0xff]
    %v216 = vld [vmem:[%s5 + $0x18] sm:$0xff]
    %v217 = vld [vmem:[%s5 + $0x20] sm:$0xff]
    %v218 = vld [vmem:[%s5 + $0x28] sm:$0xff]
    %v219 = vld [vmem:[%s5 + $0x30] sm:$0xff]
    %v220 = vld [vmem:[%s5 + $0x38] sm:$0xff]
    %v221 = vld [vmem:[%s5 + $0x40] sm:$0xff]
    %v222 = vld [vmem:[%s5 + $0x48] sm:$0xff]
    %v223 = vld [vmem:[%s5 + $0x50] sm:$0xff]
    %v224 = vld [vmem:[%s5 + $0x58] sm:$0xff]
    %v225 = vld [vmem:[%s5 + $0x60] sm:$0xff]
    %v226 = vld [vmem:[%s5 + $0x68] sm:$0xff]
    %v227 = vld [vmem:[%s5 + $0x70] sm:$0xff]
    %v228 = vld [vmem:[%s5 + $0x78] sm:$0xff]
    %v229 = vld [vmem:[%s5 + $0x80] sm:$0xff]
    %v230 = vld [vmem:[%s5 + $0x88] sm:$0xff]
    %v231 = vld [vmem:[%s5 + $0x90] sm:$0xff]
    %v232 = vld [vmem:[%s5 + $0x98] sm:$0xff]
    %v233 = vld [vmem:[%s5 + $0xa0] sm:$0xff]
    %v234 = vld [vmem:[%s5 + $0xa8] sm:$0xff]
    %v235 = vld [vmem:[%s5 + $0xb0] sm:$0xff]
    %v236 = vld [vmem:[%s5 + $0xb8] sm:$0xff]
    %v237 = vld [vmem:[%s5 + $0xc0] sm:$0xff]
    %v238 = vld [vmem:[%s5 + $0xc8] sm:$0xff]
    %v239 = vld [vmem:[%s5 + $0xd0] sm:$0xff]
    %v240 = vld [vmem:[%s5 + $0xd8] sm:$0xff]
    %v241 = vld [vmem:[%s5 + $0xe0] sm:$0xff]
    %v242 = vld [vmem:[%s5 + $0xe8] sm:$0xff]
    %v243 = vld [vmem:[%s5 + $0xf0] sm:$0xff]
    %v244 = vld [vmem:[%s5 + $0xf8] sm:$0xff]
    %v245 = vld [vmem:[%s6] sm:$0x1]
    %v246 = vld [vmem:[%s7] sm:$0x1]
    %v247 = vld [vmem:[%s8] sm:$0x1]
    %v249 = vlaneseq
    %v250 = vshrl.u32 %v249, 7
    %v251 = vsub.s32 0, %v250
    %v252 = vrot.slane %v245, %v251
    %254 = vmatprep.subr.mxu0 0.0
    %255 = vmatpush1.msra.mxu0 %v213
    %256 = vmatprep.subr.mxu0 0.0
    %257 = vmatpush1.msra.mxu0 %v214
    %258 = vmatprep.subr.mxu0 0.0
    %259 = vmatpush1.msra.mxu0 %v215
    %260 = vmatprep.subr.mxu0 0.0
    %261 = vmatpush1.msra.mxu0 %v216
    %262 = vmatprep.subr.mxu0 0.0
    %263 = vmatpush1.msra.mxu0 %v217
    %264 = vmatprep.subr.mxu0 0.0
    %265 = vmatpush1.msra.mxu0 %v218
    %266 = vmatprep.subr.mxu0 0.0
    %267 = vmatpush1.msra.mxu0 %v219
    %268 = vmatprep.subr.mxu0 0.0
    %269 = vmatpush1.msra.mxu0 %v220
    %270 = vmatprep.subr.mxu0 0.0
    %271 = vmatpush1.msra.mxu0 %v221
    %272 = vmatprep.subr.mxu0 0.0
    %273 = vmatpush1.msra.mxu0 %v222
    %274 = vmatprep.subr.mxu0 0.0
    %275 = vmatpush1.msra.mxu0 %v223
    %276 = vmatprep.subr.mxu0 0.0
    %277 = vmatpush1.msra.mxu0 %v224
    %278 = vmatprep.subr.mxu0 0.0
    %279 = vmatpush1.msra.mxu0 %v225
    %280 = vmatprep.subr.mxu0 0.0
    %281 = vmatpush1.msra.mxu0 %v226
    %282 = vmatprep.subr.mxu0 0.0
    %283 = vmatpush1.msra.mxu0 %v227
    %284 = vmatprep.subr.mxu0 0.0
    %285 = vmatpush1.msra.mxu0 %v228
    %286 = vmatprep.subr.mxu0 0.0
    %287 = vmatpush1.msra.mxu0 %v229
    %288 = vmatprep.subr.mxu0 0.0
    %289 = vmatpush1.msra.mxu0 %v230
    %290 = vmatprep.subr.mxu0 0.0
    %291 = vmatpush1.msra.mxu0 %v231
    %292 = vmatprep.subr.mxu0 0.0
    %293 = vmatpush1.msra.mxu0 %v232
    %294 = vmatprep.subr.mxu0 0.0
    %295 = vmatpush1.msra.mxu0 %v233
    %296 = vmatprep.subr.mxu0 0.0
    %297 = vmatpush1.msra.mxu0 %v234
    %298 = vmatprep.subr.mxu0 0.0
    %299 = vmatpush1.msra.mxu0 %v235
    %300 = vmatprep.subr.mxu0 0.0
    %301 = vmatpush1.msra.mxu0 %v236
    %302 = vmatprep.subr.mxu0 0.0
    %303 = vmatpush1.msra.mxu0 %v237
    %304 = vmatprep.subr.mxu0 0.0
    %305 = vmatpush1.msra.mxu0 %v238
    %306 = vmatprep.subr.mxu0 0.0
    %307 = vmatpush1.msra.mxu0 %v239
    %308 = vmatprep.subr.mxu0 0.0
    %309 = vmatpush1.msra.mxu0 %v240
    %310 = vmatprep.subr.mxu0 0.0
    %311 = vmatpush1.msra.mxu0 %v241
    %312 = vmatprep.subr.mxu0 0.0
    %313 = vmatpush1.msra.mxu0 %v242
    %314 = vmatprep.subr.mxu0 0.0
    %315 = vmatpush1.msra.mxu0 %v243
    %316 = vmatprep.subr.mxu0 0.0
    %317 = vmatpush1.msra.mxu0 %v244
    %318 = vmatprep.mubr.f32.mxu0 %v212
    %319 = vmatmul.mubr.f32.gmra.mrb[0].mxu0 %v211
    %v320 = vpop.f32.mrb[0].mxu0
    %v321 = vadd.f32 %v252, %v320
    %v322 = vpop.f32.mrb[0].mxu0
    %323 = vdwg.mxu0
    %v324 = vmax.f32 %v321, 0.0
    %325 = vadd.xlane.f32.xlu0 %v324
    %v326 = vpop.xlane.xlu0 %325
    %v327 = vmul.f32 %v326, 0.0078125
    %v328 = vsub.f32 %v324, %v327
    %v329 = vmul.f32 %v328, %v328
    %330 = vadd.xlane.f32.xlu0 %v329
    %v331 = vpop.xlane.xlu0 %330
    %v332 = vmul.f32 %v331, 0.0078125
    %v333 = vadd.f32 %v332, 1e-05
    %v334 = vrsqrt.pop %v333
    %v335 = vmul.f32 %v328, %v334
    %v337 = vlaneseq
    %v338 = vshrl.u32 %v337, 7
    %v339 = vsub.s32 0, %v338
    %v340 = vrot.slane %v246, %v339
    %v342 = vmul.f32 %v335, %v340
    %v344 = vlaneseq
    %v345 = vshrl.u32 %v344, 7
    %v346 = vsub.s32 0, %v345
    %v347 = vrot.slane %v247, %v346
    %v349 = vadd.f32 %v342, %v347
    %v350 = vld [vmem:[%s9] sm:$0xff]
    %v351 = vld [vmem:[%s9 + $0x8] sm:$0xff]
    %v352 = vld [vmem:[%s9 + $0x10] sm:$0xff]
    %v353 = vld [vmem:[%s9 + $0x18] sm:$0xff]
    %v354 = vld [vmem:[%s9 + $0x20] sm:$0xff]
    %v355 = vld [vmem:[%s9 + $0x28] sm:$0xff]
    %v356 = vld [vmem:[%s9 + $0x30] sm:$0xff]
    %v357 = vld [vmem:[%s9 + $0x38] sm:$0xff]
    %v358 = vld [vmem:[%s9 + $0x40] sm:$0xff]
    %v359 = vld [vmem:[%s9 + $0x48] sm:$0xff]
    %v360 = vld [vmem:[%s9 + $0x50] sm:$0xff]
    %v361 = vld [vmem:[%s9 + $0x58] sm:$0xff]
    %v362 = vld [vmem:[%s9 + $0x60] sm:$0xff]
    %v363 = vld [vmem:[%s9 + $0x68] sm:$0xff]
    %v364 = vld [vmem:[%s9 + $0x70] sm:$0xff]
    %v365 = vld [vmem:[%s9 + $0x78] sm:$0xff]
    %v366 = vld [vmem:[%s10] sm:$0x1]
    %v367 = vld [vmem:[%s11] sm:$0x1]
    %v368 = vld [vmem:[%s12] sm:$0x1]
    %v370 = vlaneseq
    %v371 = vshrl.u32 %v370, 7
    %v372 = vsub.s32 0, %v371
    %v373 = vrot.slane %v366, %v372
    %375 = vmatprep.subr.mxu0 0.0
    %376 = vmatpush1.msra.mxu0 %v350
    %377 = vmatprep.subr.mxu0 0.0
    %378 = vmatpush1.msra.mxu0 %v351
    %379 = vmatprep.subr.mxu0 0.0
    %380 = vmatpush1.msra.mxu0 %v352
    %381 = vmatprep.subr.mxu0 0.0
    %382 = vmatpush1.msra.mxu0 %v353
    %383 = vmatprep.subr.mxu0 0.0
    %384 = vmatpush1.msra.mxu0 %v354
    %385 = vmatprep.subr.mxu0 0.0
    %386 = vmatpush1.msra.mxu0 %v355
    %387 = vmatprep.subr.mxu0 0.0
    %388 = vmatpush1.msra.mxu0 %v356
    %389 = vmatprep.subr.mxu0 0.0
    %390 = vmatpush1.msra.mxu0 %v357
    %391 = vmatprep.subr.mxu0 0.0
    %392 = vmatpush1.msra.mxu0 %v358
    %393 = vmatprep.subr.mxu0 0.0
    %394 = vmatpush1.msra.mxu0 %v359
    %395 = vmatprep.subr.mxu0 0.0
    %396 = vmatpush1.msra.mxu0 %v360
    %397 = vmatprep.subr.mxu0 0.0
    %398 = vmatpush1.msra.mxu0 %v361
    %399 = vmatprep.subr.mxu0 0.0
    %400 = vmatpush1.msra.mxu0 %v362
    %401 = vmatprep.subr.mxu0 0.0
    %402 = vmatpush1.msra.mxu0 %v363
    %403 = vmatprep.subr.mxu0 0.0
    %404 = vmatpush1.msra.mxu0 %v364
    %405 = vmatprep.subr.mxu0 0.0
    %406 = vmatpush1.msra.mxu0 %v365
    %407 = vmatprep.subr.mxu0 0.0
    %408 = vmatpush1.msra.mxu0 0.0
    %409 = vmatprep.subr.mxu0 0.0
    %410 = vmatpush1.msra.mxu0 0.0
    %411 = vmatprep.subr.mxu0 0.0
    %412 = vmatpush1.msra.mxu0 0.0
    %413 = vmatprep.subr.mxu0 0.0
    %414 = vmatpush1.msra.mxu0 0.0
    %415 = vmatprep.subr.mxu0 0.0
    %416 = vmatpush1.msra.mxu0 0.0
    %417 = vmatprep.subr.mxu0 0.0
    %418 = vmatpush1.msra.mxu0 0.0
    %419 = vmatprep.subr.mxu0 0.0
    %420 = vmatpush1.msra.mxu0 0.0
    %421 = vmatprep.subr.mxu0 0.0
    %422 = vmatpush1.msra.mxu0 0.0
    %423 = vmatprep.subr.mxu0 0.0
    %424 = vmatpush1.msra.mxu0 0.0
    %425 = vmatprep.subr.mxu0 0.0
    %426 = vmatpush1.msra.mxu0 0.0
    %427 = vmatprep.subr.mxu0 0.0
    %428 = vmatpush1.msra.mxu0 0.0
    %429 = vmatprep.subr.mxu0 0.0
    %430 = vmatpush1.msra.mxu0 0.0
    %431 = vmatprep.subr.mxu0 0.0
    %432 = vmatpush1.msra.mxu0 0.0
    %433 = vmatprep.subr.mxu0 0.0
    %434 = vmatpush1.msra.mxu0 0.0
    %435 = vmatprep.subr.mxu0 0.0
    %436 = vmatpush1.msra.mxu0 0.0
    %437 = vmatprep.subr.mxu0 0.0
    %438 = vmatpush1.msra.mxu0 0.0
    %439 = vmatprep.mubr.f32.mxu0 0.0
    %440 = vmatmul.mubr.f32.gmra.mrb[0].mxu0 %v349
    %v441 = vpop.f32.mrb[0].mxu0
    %v442 = vadd.f32 %v373, %v441
    %v443 = vpop.f32.mrb[0].mxu0
    %444 = vdwg.mxu0
    %v445 = vmax.f32 %v442, 0.0
    %446 = vadd.xlane.f32.xlu0 %v445
    %v447 = vpop.xlane.xlu0 %446
    %v448 = vmul.f32 %v447, 0.03125
    %v449 = vlaneseq
    %v450 = vand.u32 %v449, 127
    %vm451 = vcmp.lt.s32.totalorder %v450, 32
    %v452 = vsub.f32 %v445, %v448
    %v453 = vsel %vm451, 1, 0
    %vm454 = vcmp.eq.s32.totalorder %v453, 1
    %v455 = vsel %vm454, %v452, 0.0
    %v456 = vmul.f32 %v455, %v455
    %457 = vadd.xlane.f32.xlu0 %v456
    %v458 = vpop.xlane.xlu0 %457
    %v459 = vmul.f32 %v458, 0.03125
    %v460 = vadd.f32 %v459, 1e-05
    %v461 = vrsqrt.pop %v460
    %v462 = vmul.f32 %v452, %v461
    %v464 = vlaneseq
    %v465 = vshrl.u32 %v464, 7
    %v466 = vsub.s32 0, %v465
    %v467 = vrot.slane %v367, %v466
    %v469 = vmul.f32 %v462, %v467
    %v471 = vlaneseq
    %v472 = vshrl.u32 %v471, 7
    %v473 = vsub.s32 0, %v472
    %v474 = vrot.slane %v368, %v473
    %v476 = vadd.f32 %v469, %v474
    %v477 = vld [vmem:[%s13] sm:$0xff]
    %v478 = vld [vmem:[%s13 + $0x8] sm:$0xff]
    %v479 = vld [vmem:[%s13 + $0x10] sm:$0xff]
    %v480 = vld [vmem:[%s13 + $0x18] sm:$0xff]
    %v481 = vld [vmem:[%s13 + $0x20] sm:$0xff]
    %v482 = vld [vmem:[%s13 + $0x28] sm:$0xff]
    %v483 = vld [vmem:[%s13 + $0x30] sm:$0xff]
    %v484 = vld [vmem:[%s13 + $0x38] sm:$0xff]
    %v485 = vld [vmem:[%s13 + $0x40] sm:$0xff]
    %v486 = vld [vmem:[%s13 + $0x48] sm:$0xff]
    %v487 = vld [vmem:[%s13 + $0x50] sm:$0xff]
    %v488 = vld [vmem:[%s13 + $0x58] sm:$0xff]
    %v489 = vld [vmem:[%s13 + $0x60] sm:$0xff]
    %v490 = vld [vmem:[%s13 + $0x68] sm:$0xff]
    %v491 = vld [vmem:[%s13 + $0x70] sm:$0xff]
    %v492 = vld [vmem:[%s13 + $0x78] sm:$0xff]
    %v493 = vld [vmem:[%s14] sm:$0x1]
    %v495 = vlaneseq
    %v496 = vshrl.u32 %v495, 7
    %v497 = vsub.s32 0, %v496
    %v498 = vrot.slane %v493, %v497
    %500 = vmatprep.subr.mxu0 0.0
    %501 = vmatpush1.msra.mxu0 %v477
    %502 = vmatprep.subr.mxu0 0.0
    %503 = vmatpush1.msra.mxu0 %v478
    %504 = vmatprep.subr.mxu0 0.0
    %505 = vmatpush1.msra.mxu0 %v479
    %506 = vmatprep.subr.mxu0 0.0
    %507 = vmatpush1.msra.mxu0 %v480
    %508 = vmatprep.subr.mxu0 0.0
    %509 = vmatpush1.msra.mxu0 %v481
    %510 = vmatprep.subr.mxu0 0.0
    %511 = vmatpush1.msra.mxu0 %v482
    %512 = vmatprep.subr.mxu0 0.0
    %513 = vmatpush1.msra.mxu0 %v483
    %514 = vmatprep.subr.mxu0 0.0
    %515 = vmatpush1.msra.mxu0 %v484
    %516 = vmatprep.subr.mxu0 0.0
    %517 = vmatpush1.msra.mxu0 %v485
    %518 = vmatprep.subr.mxu0 0.0
    %519 = vmatpush1.msra.mxu0 %v486
    %520 = vmatprep.subr.mxu0 0.0
    %521 = vmatpush1.msra.mxu0 %v487
    %522 = vmatprep.subr.mxu0 0.0
    %523 = vmatpush1.msra.mxu0 %v488
    %524 = vmatprep.subr.mxu0 0.0
    %525 = vmatpush1.msra.mxu0 %v489
    %526 = vmatprep.subr.mxu0 0.0
    %527 = vmatpush1.msra.mxu0 %v490
    %528 = vmatprep.subr.mxu0 0.0
    %529 = vmatpush1.msra.mxu0 %v491
    %530 = vmatprep.subr.mxu0 0.0
    %531 = vmatpush1.msra.mxu0 %v492
    %532 = vmatprep.subr.mxu0 0.0
    %533 = vmatpush1.msra.mxu0 0.0
    %534 = vmatprep.subr.mxu0 0.0
    %535 = vmatpush1.msra.mxu0 0.0
    %536 = vmatprep.subr.mxu0 0.0
    %537 = vmatpush1.msra.mxu0 0.0
    %538 = vmatprep.subr.mxu0 0.0
    %539 = vmatpush1.msra.mxu0 0.0
    %540 = vmatprep.subr.mxu0 0.0
    %541 = vmatpush1.msra.mxu0 0.0
    %542 = vmatprep.subr.mxu0 0.0
    %543 = vmatpush1.msra.mxu0 0.0
    %544 = vmatprep.subr.mxu0 0.0
    %545 = vmatpush1.msra.mxu0 0.0
    %546 = vmatprep.subr.mxu0 0.0
    %547 = vmatpush1.msra.mxu0 0.0
    %548 = vmatprep.subr.mxu0 0.0
    %549 = vmatpush1.msra.mxu0 0.0
    %550 = vmatprep.subr.mxu0 0.0
    %551 = vmatpush1.msra.mxu0 0.0
    %552 = vmatprep.subr.mxu0 0.0
    %553 = vmatpush1.msra.mxu0 0.0
    %554 = vmatprep.subr.mxu0 0.0
    %555 = vmatpush1.msra.mxu0 0.0
    %556 = vmatprep.subr.mxu0 0.0
    %557 = vmatpush1.msra.mxu0 0.0
    %558 = vmatprep.subr.mxu0 0.0
    %559 = vmatpush1.msra.mxu0 0.0
    %560 = vmatprep.subr.mxu0 0.0
    %561 = vmatpush1.msra.mxu0 0.0
    %562 = vmatprep.subr.mxu0 0.0
    %563 = vmatpush1.msra.mxu0 0.0
    %564 = vmatprep.mubr.f32.mxu0 0.0
    %565 = vmatmul.mubr.f32.gmra.mrb[0].mxu0 %v476
    %v566 = vpop.f32.mrb[0].mxu0
    %v567 = vadd.f32 %v498, %v566
    %v568 = vpop.f32.mrb[0].mxu0
    %569 = vdwg.mxu0
    %570 = vst [vmem:[#allocation2] sm:$0xff] %v567
    // Predicated region
    $region62: #{apply_fn.1} parent=1 // pred_check
      _
    $region63: #{apply_fn.1} parent=1 // pred_check_branch
      %572 = sbr.rel (0) target = $region65
    $region64: #{apply_fn.1} parent=1 // pred_region
      %s574 = ssub.s32 128, 128
      %575 = vsyncadd [#allocation3], %s574
      %s577 = sshll.u32 [#allocation2], 4
      %s578 = int_to_ptr.vmem [resolvable:$true] %s577
      %580 = dma.vmem_to_hbm [thread:$0]  %s578, 128, %s15, [#allocation3]
    $region65: #{apply_fn.1} parent=1 // pred_fallthru
      _
    // Predicated region
    $region66: #{apply_fn.1} parent=1 // pred_check
      _
    $region67: #{apply_fn.1} parent=1 // pred_check_branch
      %582 = sbr.rel (0) target = $region69
    $region68: #{apply_fn.1} parent=1 // pred_region
      %583 = dma.done [#allocation3], 128
    $region69: #{apply_fn.1} parent=1 // pred_fallthru
      _
    %584 = vsyncpa [#allocation3], 1

</llo_original>
